<compile_context>
chip_gen: v5e
topology: v5e:2x2
jax: 0.10.0
libtpu: 0.0.40
codegen_flags: <defaults>
</compile_context>

<pallas_src>
import jax
import jax.numpy as jnp
from jax.experimental import pallas as pl
from jax.experimental.pallas import tpu as pltpu


def _pick_tile(dim, candidates):
    """Largest candidate that evenly divides `dim`; fall back to the full dim
    (a full-extent block always satisfies the (8, 128) rule)."""
    for c in candidates:
        if c <= dim and dim % c == 0:
            return c
    return dim


# ----------------------------------------------------------------------------
# Kernel 1: fused "combine" linear + bridge zeros.
#   x, r   : (B, T, D)
#   Wx^T   : (D, D)   (= weight[:, :D].T)
#   Wr^T   : (D, D)   (= weight[:, D:].T)
#   bias   : (1, D)
#   out    : (B, 2, T, D)   slot 0 = x@Wx^T + r@Wr^T + b, slot 1 = zeros
#            (reshapes for free to (B, 2T, D) == concat([y, zeros], dim=1))
# Grid: (B, T/tt, D/tn, D/tk); K (contraction over D) is the innermost,
# "arbitrary", accumulator-resident axis.
# ----------------------------------------------------------------------------
def combine_kernel(x_ref, r_ref, wx_ref, wr_ref, b_ref, o_ref, acc_ref):
    k = pl.program_id(3)

    @pl.when(k == 0)
    def _init():
        acc_ref[...] = jnp.zeros_like(acc_ref)

    # Two MXU dots with f32 accumulation (same math as [x ; r] @ W^T).
    acc_ref[...] += jnp.dot(x_ref[0], wx_ref[...],
                            preferred_element_type=jnp.float32)
    acc_ref[...] += jnp.dot(r_ref[0], wr_ref[...],
                            preferred_element_type=jnp.float32)

    @pl.when(k == pl.num_programs(3) - 1)
    def _writeback():
        tt, tn = o_ref.shape[2], o_ref.shape[3]
        o_ref[0, 0] = (acc_ref[...] + b_ref[...]).astype(o_ref.dtype)
        o_ref[0, 1] = jnp.zeros((tt, tn), o_ref.dtype)   # the "bridge" zeros half


def bridge_combine(x, r, w_x_t, w_r_t, bias2d, *, tt=None, tn=None, tk=None):
    B, T, D = x.shape
    tt = tt if tt is not None else _pick_tile(T, (256, 128, 64, 32, 16, 8))
    tn = tn if tn is not None else _pick_tile(D, (512, 256, 128))
    tk = tk if tk is not None else _pick_tile(D, (512, 256, 128))
    assert T % tt == 0 and D % tn == 0 and D % tk == 0

    grid = (B, T // tt, D // tn, D // tk)

    itemsize = jnp.dtype(x.dtype).itemsize
    cost = pl.CostEstimate(
        flops=2 * (B * T) * (2 * D) * D,
        transcendentals=0,
        bytes_accessed=(2 * B * T * D + 2 * D * D + D + B * 2 * T * D) * itemsize,
    )

    out = pl.pallas_call(
        combine_kernel,
        out_shape=jax.ShapeDtypeStruct((B, 2, T, D), x.dtype),
        grid=grid,
        in_specs=[
            pl.BlockSpec((1, tt, tk), lambda b, j, n, k: (b, j, k)),   # x
            pl.BlockSpec((1, tt, tk), lambda b, j, n, k: (b, j, k)),   # r
            pl.BlockSpec((tk, tn), lambda b, j, n, k: (k, n)),         # Wx^T
            pl.BlockSpec((tk, tn), lambda b, j, n, k: (k, n)),         # Wr^T
            pl.BlockSpec((1, tn), lambda b, j, n, k: (0, n)),          # bias
        ],
        out_specs=pl.BlockSpec((1, 2, tt, tn), lambda b, j, n, k: (b, 0, j, n)),
        scratch_shapes=[pltpu.VMEM((tt, tn), jnp.float32)],
        compiler_params=pltpu.CompilerParams(
            dimension_semantics=("parallel", "parallel", "parallel", "arbitrary"),
            vmem_limit_bytes=48 * 1024 * 1024,
        ),
        cost_estimate=cost,
    )(x, r, w_x_t, w_r_t, bias2d)

    # (B, 2, T, D) -> (B, 2T, D): adjacent-axis merge, no data movement.
    return out.reshape(B, 2 * T, D)


# ----------------------------------------------------------------------------
# Kernel 2: mask bridging (tiny; kept as one simple full-block kernel).
#   mask : (B, T) -> out (B, 2T) = concat([mask, min(mask, shift_left_pad0(mask))], 1)
# ----------------------------------------------------------------------------
def mask_kernel(mask_ref, out_ref):
    m = mask_ref[...]                                         # (B, T)
    zeros_col = jnp.zeros((m.shape[0], 1), m.dtype)
    shifted = jnp.concatenate([m[:, 1:], zeros_col], axis=1)  # pad(mask[:,1:], (0,1))
    bridge = jnp.minimum(m, shifted)
    out_ref[...] = jnp.concatenate([m, bridge], axis=1)


def bridge_mask(mask):
    B, T = mask.shape
    return pl.pallas_call(
        mask_kernel,
        out_shape=jax.ShapeDtypeStruct((B, 2 * T), mask.dtype),
        grid=(1,),
        in_specs=[pl.BlockSpec((B, T), lambda i: (0, 0))],
        out_specs=pl.BlockSpec((B, 2 * T), lambda i: (0, 0)),
    )(mask)


# ----------------------------------------------------------------------------
# Module wrapper
# ----------------------------------------------------------------------------
class BridgeEmbedding:
    def __init__(self, d_model, key):
        self.d_model = d_model
        kw, kb = jax.random.split(key)
        # nn.Linear(d_model*2, d_model): weight (D, 2D), bias (D)
        bound = 1.0 / float((2.0 * d_model) ** 0.5)
        self.weight = jax.random.uniform(
            kw, (d_model, 2 * d_model), jnp.float32, -bound, bound)
        self.bias = jax.random.uniform(
            kb, (d_model,), jnp.float32, -bound, bound)
        # Pre-split / pre-transpose once (no per-call XLA transpose or [x;r] concat).
        D = d_model
        self.w_x_t = jnp.asarray(self.weight[:, :D].T)   # (D, D)
        self.w_r_t = jnp.asarray(self.weight[:, D:].T)   # (D, D)
        self.bias2d = self.bias.reshape(1, D)

    def __call__(self, x, mask, rng_key, *, tt=None, tn=None, tk=None):
        B, T, D = x.shape
        assert D == self.d_model

        # rand_pos_emb = torch.randn_like(x)  (deterministic here via rng_key)
        # TODO(synk): r could be generated in-kernel via pltpu.prng_seed/prng_random_bits
        # to save an HBM round-trip, but that changes the RNG stream vs jax.random.normal.
        r = jax.random.normal(rng_key, x.shape, x.dtype)

        # Fused: y = [x ; r] @ W^T + b  and  concat([y, zeros], dim=1), all in Pallas.
        x_out = bridge_combine(x, r, self.w_x_t, self.w_r_t, self.bias2d,
                               tt=tt, tn=tn, tk=tk)         # (B, 2T, D)

        # Mask bridging in Pallas.
        mask_out = bridge_mask(mask)                        # (B, 2T)

        return {'x': x_out, 'mask': mask_out}


if __name__ == "__main__":
    B, T, D = 2, 16, 256

    key = jax.random.PRNGKey(0)
    k_param, k_x, k_mask, k_rand = jax.random.split(key, 4)

    module = BridgeEmbedding(D, k_param)

    x = jax.random.normal(k_x, (B, T, D), jnp.float32)
    # binary-ish float mask, like an attention/padding mask
    mask = (jax.random.uniform(k_mask, (B, T)) > 0.3).astype(jnp.float32)

    # Pure-JAX reference.
    r = jax.random.normal(k_rand, x.shape, x.dtype)
    ref_y = jnp.concatenate([x, r], axis=2) @ module.weight.T + module.bias
    ref_x = jnp.concatenate([ref_y, jnp.zeros_like(r)], axis=1)
    shifted = jnp.pad(mask[:, 1:], ((0, 0), (0, 1)))
    ref_mask = jnp.concatenate([mask, jnp.minimum(mask, shifted)], axis=1)

    # 1) explicit small tiles -> exercises the full (B, J, N, K) = (2, 2, 2, 2) grid
    #    including multi-block K accumulation.
    out = module(x, mask, k_rand, tt=8, tn=128, tk=128)
    jax.block_until_ready(out['x'])
    jax.block_until_ready(out['mask'])
    assert out['x'].shape == (B, 2 * T, D)
    assert out['mask'].shape == (B, 2 * T)
    assert jnp.allclose(out['x'], ref_x, atol=2e-4, rtol=2e-4)
    assert jnp.allclose(out['mask'], ref_mask)

    # 2) default auto-picked tiles.
    out2 = module(x, mask, k_rand)
    jax.block_until_ready(out2['x'])
    assert jnp.allclose(out2['x'], ref_x, atol=2e-4, rtol=2e-4)
    assert jnp.allclose(out2['mask'], ref_mask)

    print("KERNEL_OK")
</pallas_src>

<mosaic_0001>
module attributes {stable_mosaic.version = 11 : i64} {
  func.func @combine_kernel(%arg0: i32, %arg1: i32, %arg2: i32, %arg3: i32, %arg4: memref<1x8x128xf32, #tpu.memory_space<vmem>>, %arg5: memref<1x8x128xf32, #tpu.memory_space<vmem>>, %arg6: memref<128x128xf32, #tpu.memory_space<vmem>>, %arg7: memref<128x128xf32, #tpu.memory_space<vmem>>, %arg8: memref<1x128xf32, #tpu.memory_space<vmem>>, %arg9: memref<1x2x8x128xf32, #tpu.memory_space<vmem>>, %arg10: memref<8x128xf32, #tpu.memory_space<vmem>>) attributes {dimension_semantics = [#tpu.dimension_semantics<parallel>, #tpu.dimension_semantics<parallel>, #tpu.dimension_semantics<parallel>, #tpu.dimension_semantics<arbitrary>], iteration_bounds = array<i64: 2, 2, 2, 2>, scalar_prefetch = 0 : i64, scratch_operands = 1 : i64, tpu.core_type = #tpu.core_type<tc>, window_params = [{transform_indices = @transform_0, window_bounds = array<i64: 1, 8, 128>}, {transform_indices = @transform_1, window_bounds = array<i64: 1, 8, 128>}, {transform_indices = @transform_2, window_bounds = array<i64: 128, 128>}, {transform_indices = @transform_3, window_bounds = array<i64: 128, 128>}, {transform_indices = @transform_4, window_bounds = array<i64: 1, 128>}, {transform_indices = @transform_5, window_bounds = array<i64: 1, 2, 8, 128>}]} {
    %c0_i32 = arith.constant 0 : i32
    %0 = arith.cmpi eq, %arg3, %c0_i32 : i32
    %1 = arith.extui %0 : i1 to i32
    %c0_i32_0 = arith.constant 0 : i32
    %2 = arith.cmpi ne, %1, %c0_i32_0 : i32
    scf.if %2 {
      %cst_20 = arith.constant 0.000000e+00 : f32
      %20 = vector.broadcast %cst_20 : f32 to vector<8x128xf32>
      %c0_21 = arith.constant 0 : index
      %c0_22 = arith.constant 0 : index
      %21 = vector.load %arg10[%c0_21, %c0_22] : memref<8x128xf32, #tpu.memory_space<vmem>>, vector<8x128xf32>
      tpu.vector_store %arg10[%c0_21, %c0_22], %20 {strides = array<i32>} : memref<8x128xf32, #tpu.memory_space<vmem>>, vector<8x128xf32>,
    } else {
    }
    %c0 = arith.constant 0 : index
    %c0_1 = arith.constant 0 : index
    %3 = vector.load %arg10[%c0, %c0_1] : memref<8x128xf32, #tpu.memory_space<vmem>>, vector<8x128xf32>
    %c0_2 = arith.constant 0 : index
    %c0_3 = arith.constant 0 : index
    %c0_4 = arith.constant 0 : index
    %4 = vector.load %arg4[%c0_2, %c0_3, %c0_4] : memref<1x8x128xf32, #tpu.memory_space<vmem>>, vector<1x8x128xf32>
    %5 = vector.shape_cast %4 : vector<1x8x128xf32> to vector<8x128xf32>
    %c0_5 = arith.constant 0 : index
    %c0_6 = arith.constant 0 : index
    %6 = vector.load %arg6[%c0_5, %c0_6] : memref<128x128xf32, #tpu.memory_space<vmem>>, vector<128x128xf32>
    %cst = arith.constant dense<0.000000e+00> : vector<8x128xf32>
    %7 = tpu.matmul %5, %6, %cst {dimension_numbers = #tpu.dot_dimension_numbers<[1], [0], [0], [1], [0, 0, 1, 1], [], []>} : vector<8x128xf32>, vector<128x128xf32>, vector<8x128xf32> -> vector<8x128xf32>
    %8 = arith.addf %3, %7 : vector<8x128xf32>
    %c0_7 = arith.constant 0 : index
    %c0_8 = arith.constant 0 : index
    %9 = vector.load %arg10[%c0_7, %c0_8] : memref<8x128xf32, #tpu.memory_space<vmem>>, vector<8x128xf32>
    tpu.vector_store %arg10[%c0_7, %c0_8], %8 {strides = array<i32>} : memref<8x128xf32, #tpu.memory_space<vmem>>, vector<8x128xf32>,
    %c0_9 = arith.constant 0 : index
    %c0_10 = arith.constant 0 : index
    %10 = vector.load %arg10[%c0_9, %c0_10] : memref<8x128xf32, #tpu.memory_space<vmem>>, vector<8x128xf32>
    %c0_11 = arith.constant 0 : index
    %c0_12 = arith.constant 0 : index
    %c0_13 = arith.constant 0 : index
    %11 = vector.load %arg5[%c0_11, %c0_12, %c0_13] : memref<1x8x128xf32, #tpu.memory_space<vmem>>, vector<1x8x128xf32>
    %12 = vector.shape_cast %11 : vector<1x8x128xf32> to vector<8x128xf32>
    %c0_14 = arith.constant 0 : index
    %c0_15 = arith.constant 0 : index
    %13 = vector.load %arg7[%c0_14, %c0_15] : memref<128x128xf32, #tpu.memory_space<vmem>>, vector<128x128xf32>
    %cst_16 = arith.constant dense<0.000000e+00> : vector<8x128xf32>
    %14 = tpu.matmul %12, %13, %cst_16 {dimension_numbers = #tpu.dot_dimension_numbers<[1], [0], [0], [1], [0, 0, 1, 1], [], []>} : vector<8x128xf32>, vector<128x128xf32>, vector<8x128xf32> -> vector<8x128xf32>
    %15 = arith.addf %10, %14 : vector<8x128xf32>
    %c0_17 = arith.constant 0 : index
    %c0_18 = arith.constant 0 : index
    %16 = vector.load %arg10[%c0_17, %c0_18] : memref<8x128xf32, #tpu.memory_space<vmem>>, vector<8x128xf32>
    tpu.vector_store %arg10[%c0_17, %c0_18], %15 {strides = array<i32>} : memref<8x128xf32, #tpu.memory_space<vmem>>, vector<8x128xf32>,
    %c1_i32 = arith.constant 1 : i32
    %17 = arith.cmpi eq, %arg3, %c1_i32 : i32
    %18 = arith.extui %17 : i1 to i32
    %c0_i32_19 = arith.constant 0 : i32
    %19 = arith.cmpi ne, %18, %c0_i32_19 : i32
    scf.if %19 {
      %c0_20 = arith.constant 0 : index
      %c0_21 = arith.constant 0 : index
      %20 = vector.load %arg10[%c0_20, %c0_21] : memref<8x128xf32, #tpu.memory_space<vmem>>, vector<8x128xf32>
      %c0_22 = arith.constant 0 : index
      %c0_23 = arith.constant 0 : index
      %21 = vector.load %arg8[%c0_22, %c0_23] : memref<1x128xf32, #tpu.memory_space<vmem>>, vector<1x128xf32>
      %22 = vector.broadcast %21 : vector<1x128xf32> to vector<8x128xf32>
      %23 = arith.addf %20, %22 : vector<8x128xf32>
      %c0_24 = arith.constant 0 : index
      %c0_25 = arith.constant 0 : index
      %c0_26 = arith.constant 0 : index
      %c0_27 = arith.constant 0 : index
      %24 = vector.load %arg9[%c0_24, %c0_25, %c0_26, %c0_27] : memref<1x2x8x128xf32, #tpu.memory_space<vmem>>, vector<1x1x8x128xf32>
      %25 = vector.shape_cast %24 : vector<1x1x8x128xf32> to vector<8x128xf32>
      %26 = vector.shape_cast %23 : vector<8x128xf32> to vector<1x1x8x128xf32>
      tpu.vector_store %arg9[%c0_24, %c0_25, %c0_26, %c0_27], %26 {strides = array<i32>} : memref<1x2x8x128xf32, #tpu.memory_space<vmem>>, vector<1x1x8x128xf32>,
      %cst_28 = arith.constant 0.000000e+00 : f32
      %27 = vector.broadcast %cst_28 : f32 to vector<8x128xf32>
      %c0_29 = arith.constant 0 : index
      %c1 = arith.constant 1 : index
      %c0_30 = arith.constant 0 : index
      %c0_31 = arith.constant 0 : index
      %28 = vector.load %arg9[%c0_29, %c1, %c0_30, %c0_31] : memref<1x2x8x128xf32, #tpu.memory_space<vmem>>, vector<1x1x8x128xf32>
      %29 = vector.shape_cast %28 : vector<1x1x8x128xf32> to vector<8x128xf32>
      %30 = vector.shape_cast %27 : vector<8x128xf32> to vector<1x1x8x128xf32>
      tpu.vector_store %arg9[%c0_29, %c1, %c0_30, %c0_31], %30 {strides = array<i32>} : memref<1x2x8x128xf32, #tpu.memory_space<vmem>>, vector<1x1x8x128xf32>,
    } else {
    }
    return
  }
  func.func @transform_0(%arg0: i32, %arg1: i32, %arg2: i32, %arg3: i32) -> (i32, i32, i32) {
    %c0_i32 = arith.constant 0 : i32
    return %arg0, %arg1, %arg3 : i32, i32, i32
  }
  func.func @transform_1(%arg0: i32, %arg1: i32, %arg2: i32, %arg3: i32) -> (i32, i32, i32) {
    %c0_i32 = arith.constant 0 : i32
    return %arg0, %arg1, %arg3 : i32, i32, i32
  }
  func.func @transform_2(%arg0: i32, %arg1: i32, %arg2: i32, %arg3: i32) -> (i32, i32) {
    %c0_i32 = arith.constant 0 : i32
    return %arg3, %arg2 : i32, i32
  }
  func.func @transform_3(%arg0: i32, %arg1: i32, %arg2: i32, %arg3: i32) -> (i32, i32) {
    %c0_i32 = arith.constant 0 : i32
    return %arg3, %arg2 : i32, i32
  }
  func.func @transform_4(%arg0: i32, %arg1: i32, %arg2: i32, %arg3: i32) -> (i32, i32) {
    %c0_i32 = arith.constant 0 : i32
    %c0_i32_0 = arith.constant 0 : i32
    return %c0_i32, %arg2 : i32, i32
  }
  func.func @transform_5(%arg0: i32, %arg1: i32, %arg2: i32, %arg3: i32) -> (i32, i32, i32, i32) {
    %c0_i32 = arith.constant 0 : i32
    %c0_i32_0 = arith.constant 0 : i32
    return %arg0, %c0_i32, %arg1, %arg2 : i32, i32, i32, i32
  }
}

</mosaic_0001>

<llo_original>
// kernel: tpu_custom_call.1
$region0: #{tpu_custom_call.1}
  #allocation0 [shape = 'u32[]', space=smem, size = 0x4, offset = 0x4, fixed_abs, tag = 'smem constant byte address 0x4 - core index']
  #allocation1 [shape = 'u32[72,128]{1,0:T(1,128)}', space=vmem, size = 0x9000, scoped, tag = 'internal scratch']
  #allocation2 [shape = 'f32[8,128]{1,0:T(8,128)}', space=vmem, size = 0x1000, scoped, tag = 'scratch operand']
  %s0 = inlined_call_operand.hbm [shape: f32[2,16,256], index: 0, kind: input, shape index: {}]
  %s1 = inlined_call_operand.hbm [shape: f32[2,16,256], index: 1, kind: input, shape index: {}]
  %s2 = inlined_call_operand.hbm [shape: f32[256,256], index: 2, kind: input, shape index: {}]
  %s3 = inlined_call_operand.hbm [shape: f32[256,256], index: 3, kind: input, shape index: {}]
  %s4 = inlined_call_operand.vmem [shape: f32[1,256], index: 4, kind: input, shape index: {}]
  %s5 = inlined_call_operand.hbm [shape: f32[2,2,16,256], index: 5, kind: output, shape index: {}]
  %s6 = sld [smem:[#allocation0]]
  $region77: #{tpu_custom_call.1} parent=0
    _
  %s8 = ssub.s32 1, %s6
  %s9 = scalar_select 0, %s8, %s6
  $region1: #{tpu_custom_call.1} parent=0
    #allocation3 [shape = 'u8[8192]{0}', space=vmem, size = 0x2000, scoped, tag = 'input window, operand 0']
    #allocation4 [shape = 's32[2]{0}', space=sflag, size = 0x8, scoped, tag = 'scoped memory for tpu_custom_call.1']
    #allocation5 [shape = 's32[2]{0}', space=sflag, size = 0x8, scoped, tag = 'scoped memory for tpu_custom_call.1']
    #allocation6 [shape = 'u8[8192]{0}', space=vmem, size = 0x2000, scoped, tag = 'input window, operand 1']
    #allocation7 [shape = 's32[2]{0}', space=sflag, size = 0x8, scoped, tag = 'scoped memory for tpu_custom_call.1']
    #allocation8 [shape = 'u8[131072]{0}', space=vmem, size = 0x20000, scoped, tag = 'input window, operand 2']
    #allocation9 [shape = 'u8[131072]{0}', space=vmem, size = 0x20000, scoped, tag = 'input window, operand 3']
    #allocation10 [shape = 's32[2]{0}', space=sflag, size = 0x8, scoped, tag = 'scoped memory for tpu_custom_call.1']
    #allocation11 [shape = 'u8[16384]{0}', space=vmem, size = 0x4000, scoped, tag = 'output window, operand 0']
    %10 = vsyncpa [#allocation4], 0
    %s11 = scalar_lea.sflag [#allocation4], 1
    %12 = vsyncpa %s11, 0
    %13 = vsyncpa [#allocation7], 0
    %s14 = scalar_lea.sflag [#allocation7], 1
    %15 = vsyncpa %s14, 0
    %16 = vsyncpa [#allocation10], 0
    %s17 = scalar_lea.sflag [#allocation10], 1
    %18 = vsyncpa %s17, 0
    %19 = vsyncpa [#allocation5], 0
    %s20 = scalar_lea.sflag [#allocation5], 1
    %21 = vsyncpa %s20, 0
    loop: start=0, step=1, limit=18
    $region2: #{tpu_custom_call.1} parent=1 // loop_pre_header
      _
    $region3: #{tpu_custom_call.1} parent=1 // loop_header
      %s23 = sphi 0, %s27
      %p24 = scmp.ge.s32.totalorder %s23, 18
      %s30 = sphi 0, %s56
      %s31 = sphi 0, %s52
      %s32 = sphi 0, %s48
      %s33 = sphi 0, %s44
      %s34 = sphi 0, %s30
      %s35 = sphi 0, %s31
      %s36 = sphi 0, %s32
      %s37 = sphi 0, %s33
      %s38 = sphi 0, %s34
      %s39 = sphi 0, %s35
      %s40 = sphi 0, %s36
      %s41 = sphi 0, %s37
      %s63 = sphi 0, %s65
      %s66 = sphi 0, %s63
      %s67 = sphi 0, %s66
      %s83 = sphi 0, %s67
      %s93 = sphi 0, %s95
      %s96 = sphi 0, %s93
      %s97 = sphi 0, %s96
      %s113 = sphi 0, %s97
      %s121 = sphi 0, %s123
      %s124 = sphi 0, %s121
      %s125 = sphi 0, %s124
      %s141 = sphi 0, %s125
      %s149 = sphi 0, %s151
      %s152 = sphi 0, %s149
      %s153 = sphi 0, %s152
      %s169 = sphi 0, %s153
      %s175 = sphi 0, %s177
      %s178 = sphi 0, %s175
      %s179 = sphi 0, %s178
      %s195 = sphi 0, %s179
      %s205 = sphi 0, %s207
      %s208 = sphi 0, %s205
      %s209 = sphi 0, %s208
      %s225 = sphi 0, %s209
    $region4: #{tpu_custom_call.1} parent=1 // loop_header_branch
      %26 = sbr.rel (%p24) target = $region8
    $region5: #{tpu_custom_call.1} parent=1 // loop_body
      %s28 = ssub.s32 %s23, 1
      %s29 = ssub.s32 %s23, 2
      %s42 = sadd.s32 1, %s33
      %p43 = scmp.ge.s32.totalorder %s42, 2
      %s44 = scalar_select %p43, 0, %s42
      %s45 = sadd.s32 1, %s32
      %s46 = scalar_select %p43, %s45, %s32
      %p47 = scmp.ge.s32.totalorder %s46, 2
      %s48 = scalar_select %p47, 0, %s46
      %s49 = sadd.s32 1, %s31
      %s50 = scalar_select %p47, %s49, %s31
      %p51 = scmp.ge.s32.totalorder %s50, 2
      %s52 = scalar_select %p51, 0, %s50
      %s53 = sadd.s32 1, %s30
      %s54 = scalar_select %p51, %s53, %s30
      %p55 = scmp.ge.s32.totalorder %s54, 2
      %s56 = scalar_select %p55, 0, %s54
      %s57 = ssub.s32 %s30, %s56
      %s58 = ssub.s32 %s31, %s52
      %s59 = sor.u32 %s57, %s58
      %s60 = ssub.s32 %s33, %s44
      %s61 = sor.u32 %s59, %s60
      %p62 = scmp.eq.s32.totalorder %s61, 0
      %s64 = sadd.s32 %s63, 1
      %s65 = scalar_select %p62, %s63, %s64
      %p68 = pneg %p62
      %p69 = scmp.eq.s32.totalorder %s23, 15
      %p70 = por %p68, %p69
      %p71 = scmp.ne.s32.totalorder %s63, %s66
      %p72 = scmp.eq.s32.totalorder %s23, 0
      %p73 = por %p71, %p72
      %p74 = scmp.ne.s32.totalorder %s63, %s66
      %p75 = scmp.eq.s32.totalorder %s28, 15
      %p76 = por %p74, %p75
      %p77 = scmp.ne.s32.totalorder %s66, %s67
      %p78 = scmp.eq.s32.totalorder %s28, 0
      %p79 = por %p77, %p78
      %p80 = scmp.ne.s32.totalorder %s66, %s67
      %p81 = scmp.eq.s32.totalorder %s29, 15
      %p82 = por %p80, %p81
      %p84 = scmp.ne.s32.totalorder %s67, %s83
      %p85 = scmp.eq.s32.totalorder %s29, 0
      %p86 = por %p84, %p85
      %s87 = ssub.s32 %s30, %s56
      %s88 = ssub.s32 %s31, %s52
      %s89 = sor.u32 %s87, %s88
      %s90 = ssub.s32 %s33, %s44
      %s91 = sor.u32 %s89, %s90
      %p92 = scmp.eq.s32.totalorder %s91, 0
      %s94 = sadd.s32 %s93, 1
      %s95 = scalar_select %p92, %s93, %s94
      %p98 = pneg %p92
      %p99 = scmp.eq.s32.totalorder %s23, 15
      %p100 = por %p98, %p99
      %p101 = scmp.ne.s32.totalorder %s93, %s96
      %p102 = scmp.eq.s32.totalorder %s23, 0
      %p103 = por %p101, %p102
      %p104 = scmp.ne.s32.totalorder %s93, %s96
      %p105 = scmp.eq.s32.totalorder %s28, 15
      %p106 = por %p104, %p105
      %p107 = scmp.ne.s32.totalorder %s96, %s97
      %p108 = scmp.eq.s32.totalorder %s28, 0
      %p109 = por %p107, %p108
      %p110 = scmp.ne.s32.totalorder %s96, %s97
      %p111 = scmp.eq.s32.totalorder %s29, 15
      %p112 = por %p110, %p111
      %p114 = scmp.ne.s32.totalorder %s97, %s113
      %p115 = scmp.eq.s32.totalorder %s29, 0
      %p116 = por %p114, %p115
      %s117 = ssub.s32 %s33, %s44
      %s118 = ssub.s32 %s32, %s48
      %s119 = sor.u32 %s117, %s118
      %p120 = scmp.eq.s32.totalorder %s119, 0
      %s122 = sadd.s32 %s121, 1
      %s123 = scalar_select %p120, %s121, %s122
      %p126 = pneg %p120
      %p127 = scmp.eq.s32.totalorder %s23, 15
      %p128 = por %p126, %p127
      %p129 = scmp.ne.s32.totalorder %s121, %s124
      %p130 = scmp.eq.s32.totalorder %s23, 0
      %p131 = por %p129, %p130
      %p132 = scmp.ne.s32.totalorder %s121, %s124
      %p133 = scmp.eq.s32.totalorder %s28, 15
      %p134 = por %p132, %p133
      %p135 = scmp.ne.s32.totalorder %s124, %s125
      %p136 = scmp.eq.s32.totalorder %s28, 0
      %p137 = por %p135, %p136
      %p138 = scmp.ne.s32.totalorder %s124, %s125
      %p139 = scmp.eq.s32.totalorder %s29, 15
      %p140 = por %p138, %p139
      %p142 = scmp.ne.s32.totalorder %s125, %s141
      %p143 = scmp.eq.s32.totalorder %s29, 0
      %p144 = por %p142, %p143
      %s145 = ssub.s32 %s33, %s44
      %s146 = ssub.s32 %s32, %s48
      %s147 = sor.u32 %s145, %s146
      %p148 = scmp.eq.s32.totalorder %s147, 0
      %s150 = sadd.s32 %s149, 1
      %s151 = scalar_select %p148, %s149, %s150
      %p154 = pneg %p148
      %p155 = scmp.eq.s32.totalorder %s23, 15
      %p156 = por %p154, %p155
      %p157 = scmp.ne.s32.totalorder %s149, %s152
      %p158 = scmp.eq.s32.totalorder %s23, 0
      %p159 = por %p157, %p158
      %p160 = scmp.ne.s32.totalorder %s149, %s152
      %p161 = scmp.eq.s32.totalorder %s28, 15
      %p162 = por %p160, %p161
      %p163 = scmp.ne.s32.totalorder %s152, %s153
      %p164 = scmp.eq.s32.totalorder %s28, 0
      %p165 = por %p163, %p164
      %p166 = scmp.ne.s32.totalorder %s152, %s153
      %p167 = scmp.eq.s32.totalorder %s29, 15
      %p168 = por %p166, %p167
      %p170 = scmp.ne.s32.totalorder %s153, %s169
      %p171 = scmp.eq.s32.totalorder %s29, 0
      %p172 = por %p170, %p171
      %s173 = ssub.s32 %s32, %s48
      %p174 = scmp.eq.s32.totalorder %s173, 0
      %s176 = sadd.s32 %s175, 1
      %s177 = scalar_select %p174, %s175, %s176
      %p180 = pneg %p174
      %p181 = scmp.eq.s32.totalorder %s23, 15
      %p182 = por %p180, %p181
      %p183 = scmp.ne.s32.totalorder %s175, %s178
      %p184 = scmp.eq.s32.totalorder %s23, 0
      %p185 = por %p183, %p184
      %p186 = scmp.ne.s32.totalorder %s175, %s178
      %p187 = scmp.eq.s32.totalorder %s28, 15
      %p188 = por %p186, %p187
      %p189 = scmp.ne.s32.totalorder %s178, %s179
      %p190 = scmp.eq.s32.totalorder %s28, 0
      %p191 = por %p189, %p190
      %p192 = scmp.ne.s32.totalorder %s178, %s179
      %p193 = scmp.eq.s32.totalorder %s29, 15
      %p194 = por %p192, %p193
      %p196 = scmp.ne.s32.totalorder %s179, %s195
      %p197 = scmp.eq.s32.totalorder %s29, 0
      %p198 = por %p196, %p197
      %s199 = ssub.s32 %s30, %s56
      %s200 = ssub.s32 %s31, %s52
      %s201 = sor.u32 %s199, %s200
      %s202 = ssub.s32 %s32, %s48
      %s203 = sor.u32 %s201, %s202
      %p204 = scmp.eq.s32.totalorder %s203, 0
      %s206 = sadd.s32 %s205, 1
      %s207 = scalar_select %p204, %s205, %s206
      %p210 = pneg %p204
      %p211 = scmp.eq.s32.totalorder %s23, 15
      %p212 = por %p210, %p211
      %p213 = scmp.ne.s32.totalorder %s205, %s208
      %p214 = scmp.eq.s32.totalorder %s23, 0
      %p215 = por %p213, %p214
      %p216 = scmp.ne.s32.totalorder %s205, %s208
      %p217 = scmp.eq.s32.totalorder %s28, 15
      %p218 = por %p216, %p217
      %p219 = scmp.ne.s32.totalorder %s208, %s209
      %p220 = scmp.eq.s32.totalorder %s28, 0
      %p221 = por %p219, %p220
      %p222 = scmp.ne.s32.totalorder %s208, %s209
      %p223 = scmp.eq.s32.totalorder %s29, 15
      %p224 = por %p222, %p223
      %p226 = scmp.ne.s32.totalorder %s209, %s225
      %p227 = scmp.eq.s32.totalorder %s29, 0
      %p228 = por %p226, %p227
      %p229 = scmp.le.s32.totalorder 1, %s23
      %p230 = scmp.lt.s32.totalorder %s23, 17
      %p231 = pnand %p229, %p230
      %p232 = pneg %p231
      // Predicated region
      $region9: #{tpu_custom_call.1} parent=5 // pred_check
        _
      $region10: #{tpu_custom_call.1} parent=5 // pred_check_branch
        %234 = sbr.rel (%p231) target = $region12
      $region11: #{tpu_custom_call.1} parent=5 // pred_region
        %s235 = ssub.s32 %s23, 1
      $region12: #{tpu_custom_call.1} parent=5 // pred_fallthru
        _
      %p236 = scmp.lt.s32.totalorder %s23, 16
      // Predicated region
      $region13: #{tpu_custom_call.1} parent=5 // pred_check
        %p237 = pneg %p236
      $region14: #{tpu_custom_call.1} parent=5 // pred_check_branch
        %239 = sbr.rel (%p237) target = $region16
      $region15: #{tpu_custom_call.1} parent=5 // pred_region
        // Predicated region
        $region17: #{tpu_custom_call.1} parent=15 // pred_check
          %p240 = pneg %p73
        $region18: #{tpu_custom_call.1} parent=15 // pred_check_branch
          %242 = sbr.rel (%p240) target = $region20
        $region19: #{tpu_custom_call.1} parent=15 // pred_region
          %s243 = sand.u32 %s63, 1
          %s244 = scalar_lea.sflag [#allocation4], %s243
          %s245 = sand.u32 %s63, 1
          %s246 = smul.addr %s245, 8
          %s247 = scalar_lea.vmem [#allocation3], %s246
          %249 = vsyncadd %s244, 0
          %s250 = smul.addr %s31, 2
          %s251 = sadd.s32 %s33, %s250
          %s252 = smul.addr %s30, 4
          %s253 = sadd.s32 %s251, %s252
          %s254 = smul.addr %s253, 8
          %s255 = scalar_lea.hbm %s0, %s254
          %s257 = sshll.u32 %s255, 4
          %s258 = int_to_ptr.hbm [resolvable:$true] %s257
          %s259 = sshll.u32 %s247, 4
          %s260 = int_to_ptr.vmem [resolvable:$true] %s259
          %262 = dma.hbm_to_vmem [thread:$0]  %s258, 128, %s260, %s244
        $region20: #{tpu_custom_call.1} parent=15 // pred_fallthru
          _
        // Predicated region
        $region21: #{tpu_custom_call.1} parent=15 // pred_check
          %p263 = pneg %p103
        $region22: #{tpu_custom_call.1} parent=15 // pred_check_branch
          %265 = sbr.rel (%p263) target = $region24
        $region23: #{tpu_custom_call.1} parent=15 // pred_region
          %s266 = sand.u32 %s23, 1
          %s267 = scalar_lea.sflag [#allocation7], %s266
          %s268 = sand.u32 %s93, 1
          %s269 = smul.addr %s268, 8
          %s270 = scalar_lea.vmem [#allocation6], %s269
          %272 = vsyncadd %s267, 0
          %s273 = smul.addr %s31, 2
          %s274 = sadd.s32 %s33, %s273
          %s275 = smul.addr %s30, 4
          %s276 = sadd.s32 %s274, %s275
          %s277 = smul.addr %s276, 8
          %s278 = scalar_lea.hbm %s1, %s277
          %s280 = sshll.u32 %s278, 4
          %s281 = int_to_ptr.hbm [resolvable:$true] %s280
          %s282 = sshll.u32 %s270, 4
          %s283 = int_to_ptr.vmem [resolvable:$true] %s282
          %285 = dma.hbm_to_vmem [thread:$0]  %s281, 128, %s283, %s267
        $region24: #{tpu_custom_call.1} parent=15 // pred_fallthru
          _
        // Predicated region
        $region25: #{tpu_custom_call.1} parent=15 // pred_check
          %p286 = pneg %p131
        $region26: #{tpu_custom_call.1} parent=15 // pred_check_branch
          %288 = sbr.rel (%p286) target = $region28
        $region27: #{tpu_custom_call.1} parent=15 // pred_region
          %s289 = sand.u32 %s23, 1
          %s290 = scalar_lea.sflag [#allocation7], %s289
          %s291 = sand.u32 %s121, 1
          %s292 = smul.addr %s291, 128
          %s293 = scalar_lea.vmem [#allocation8], %s292
          %s294 = smul.u32 16, %s33
          %296 = vsyncadd %s290, 0
          %s297 = smul.addr %s294, 2
          %s298 = sadd.s32 %s32, %s297
          %s299 = smul.addr %s298, 8
          %s300 = scalar_lea.hbm %s2, %s299
          %s301 = sshll.u32 %s300, 4
          %s302 = int_to_ptr.hbm [resolvable:$true] %s301
          %s303 = sshll.u32 %s293, 4
          %s304 = int_to_ptr.vmem [resolvable:$true] %s303
          %309 = dma.hbm_to_vmem [thread:$0]  %s302, 2048, %s304, %s290, 256, 128, 8
        $region28: #{tpu_custom_call.1} parent=15 // pred_fallthru
          _
        // Predicated region
        $region29: #{tpu_custom_call.1} parent=15 // pred_check
          %p310 = pneg %p159
        $region30: #{tpu_custom_call.1} parent=15 // pred_check_branch
          %312 = sbr.rel (%p310) target = $region32
        $region31: #{tpu_custom_call.1} parent=15 // pred_region
          %s313 = sand.u32 %s149, 1
          %s314 = scalar_lea.sflag [#allocation10], %s313
          %s315 = sand.u32 %s149, 1
          %s316 = smul.addr %s315, 128
          %s317 = scalar_lea.vmem [#allocation9], %s316
          %s318 = smul.u32 16, %s33
          %320 = vsyncadd %s314, 0
          %s321 = smul.addr %s318, 2
          %s322 = sadd.s32 %s32, %s321
          %s323 = smul.addr %s322, 8
          %s324 = scalar_lea.hbm %s3, %s323
          %s325 = sshll.u32 %s324, 4
          %s326 = int_to_ptr.hbm [resolvable:$true] %s325
          %s327 = sshll.u32 %s317, 4
          %s328 = int_to_ptr.vmem [resolvable:$true] %s327
          %333 = dma.hbm_to_vmem [thread:$0]  %s326, 2048, %s328, %s314, 256, 128, 8
        $region32: #{tpu_custom_call.1} parent=15 // pred_fallthru
          _
        // Predicated region
        $region33: #{tpu_custom_call.1} parent=15 // pred_check
          %p334 = pneg %p185
        $region34: #{tpu_custom_call.1} parent=15 // pred_check_branch
          %336 = sbr.rel (%p334) target = $region36
        $region35: #{tpu_custom_call.1} parent=15 // pred_region
          %p337 = scmp.lt.s32.totalorder %s32, 1
          %s338 = scalar_select %p337, %s32, 1
          %s339 = scalar_lea.vmem %s4, %s338
        $region36: #{tpu_custom_call.1} parent=15 // pred_fallthru
          _
      $region16: #{tpu_custom_call.1} parent=5 // pred_fallthru
        _
      %p340 = scmp.le.s32.totalorder 1, %s23
      %p341 = scmp.lt.s32.totalorder %s23, 17
      %p342 = pnand %p340, %p341
      %p343 = pneg %p342
      // Predicated region
      $region37: #{tpu_custom_call.1} parent=5 // pred_check
        _
      $region38: #{tpu_custom_call.1} parent=5 // pred_check_branch
        %345 = sbr.rel (%p342) target = $region40
      $region39: #{tpu_custom_call.1} parent=5 // pred_region
        %s346 = ssub.s32 %s23, 1
        %s347 = sand.u32 %s66, 1
        %s348 = scalar_lea.sflag [#allocation4], %s347
        %s349 = sand.u32 %s66, 1
        %s350 = smul.addr %s349, 8
        %s351 = scalar_lea.vmem [#allocation3], %s350
        // Predicated region
        $region41: #{tpu_custom_call.1} parent=39 // pred_check
          %p352 = pneg %p79
        $region42: #{tpu_custom_call.1} parent=39 // pred_check_branch
          %354 = sbr.rel (%p352) target = $region44
        $region43: #{tpu_custom_call.1} parent=39 // pred_region
          %356 = dma.done %s348, 128
        $region44: #{tpu_custom_call.1} parent=39 // pred_fallthru
          _
        %s357 = sand.u32 %s28, 1
        %s358 = scalar_lea.sflag [#allocation7], %s357
        %s359 = sand.u32 %s96, 1
        %s360 = smul.addr %s359, 8
        %s361 = scalar_lea.vmem [#allocation6], %s360
        // Predicated region
        $region45: #{tpu_custom_call.1} parent=39 // pred_check
          %p362 = pneg %p109
        $region46: #{tpu_custom_call.1} parent=39 // pred_check_branch
          %364 = sbr.rel (%p362) target = $region48
        $region47: #{tpu_custom_call.1} parent=39 // pred_region
          %366 = dma.done %s358, 128
        $region48: #{tpu_custom_call.1} parent=39 // pred_fallthru
          _
        %s367 = sand.u32 %s28, 1
        %s368 = scalar_lea.sflag [#allocation7], %s367
        %s369 = sand.u32 %s124, 1
        %s370 = smul.addr %s369, 128
        %s371 = scalar_lea.vmem [#allocation8], %s370
        // Predicated region
        $region49: #{tpu_custom_call.1} parent=39 // pred_check
          %p372 = pneg %p137
        $region50: #{tpu_custom_call.1} parent=39 // pred_check_branch
          %374 = sbr.rel (%p372) target = $region52
        $region51: #{tpu_custom_call.1} parent=39 // pred_region
          %376 = dma.done %s368, 2048
        $region52: #{tpu_custom_call.1} parent=39 // pred_fallthru
          _
        %s377 = sand.u32 %s152, 1
        %s378 = scalar_lea.sflag [#allocation10], %s377
        %s379 = sand.u32 %s152, 1
        %s380 = smul.addr %s379, 128
        %s381 = scalar_lea.vmem [#allocation9], %s380
        // Predicated region
        $region53: #{tpu_custom_call.1} parent=39 // pred_check
          %p382 = pneg %p165
        $region54: #{tpu_custom_call.1} parent=39 // pred_check_branch
          %384 = sbr.rel (%p382) target = $region56
        $region55: #{tpu_custom_call.1} parent=39 // pred_region
          %386 = dma.done %s378, 2048
        $region56: #{tpu_custom_call.1} parent=39 // pred_fallthru
          _
        %s387 = sand.u32 %s66, 1
        %s388 = scalar_lea.sflag [#allocation4], %s387
        %s389 = sand.u32 %s66, 1
        %s390 = smul.addr %s389, 8
        %s391 = scalar_lea.vmem [#allocation3], %s390
        %p392 = pneg %p79
        %p393 = pneg %p76
        %s394 = sand.u32 %s28, 1
        %s395 = scalar_lea.sflag [#allocation7], %s394
        %s396 = sand.u32 %s96, 1
        %s397 = smul.addr %s396, 8
        %s398 = scalar_lea.vmem [#allocation6], %s397
        %p399 = pneg %p109
        %p400 = pneg %p106
        %s401 = sand.u32 %s28, 1
        %s402 = scalar_lea.sflag [#allocation7], %s401
        %s403 = sand.u32 %s124, 1
        %s404 = smul.addr %s403, 128
        %s405 = scalar_lea.vmem [#allocation8], %s404
        %p406 = pneg %p137
        %p407 = pneg %p134
        %s408 = sand.u32 %s152, 1
        %s409 = scalar_lea.sflag [#allocation10], %s408
        %s410 = sand.u32 %s152, 1
        %s411 = smul.addr %s410, 128
        %s412 = scalar_lea.vmem [#allocation9], %s411
        %p413 = pneg %p165
        %p414 = pneg %p162
        %p415 = scmp.lt.s32.totalorder %s36, 1
        %s416 = scalar_select %p415, %s36, 1
        %s417 = scalar_lea.vmem %s4, %s416
        %p418 = pneg %p191
        %p419 = pneg %p188
        %p420 = pneg %p221
        %p421 = pneg %p218
        %s422 = sand.u32 %s208, 1
        %s423 = scalar_lea.sflag [#allocation5], %s422
        %s424 = sand.u32 %s208, 1
        %s425 = smul.addr %s424, 16
        %s426 = scalar_lea.vmem [#allocation11], %s425
        %s427 = smul.u32 16, %s37
        %s428 = smul.u32 16, %s37
        %p429 = scmp.lt.s32.totalorder %s36, 1
        %s430 = scalar_select %p429, %s36, 1
        %s431 = scalar_lea.vmem %s4, %s430
        %p432 = scmp.eq.s32.totalorder %s37, 0
        // Predicated region
        $region57: #{tpu_custom_call.1} parent=39 // pred_check
          %p433 = pneg %p432
        $region58: #{tpu_custom_call.1} parent=39 // pred_check_branch
          %435 = sbr.rel (%p433) target = $region60
        $region59: #{tpu_custom_call.1} parent=39 // pred_region
          %436 = vst [vmem:[#allocation2] sm:$0xff] 0.0
        $region60: #{tpu_custom_call.1} parent=39 // pred_fallthru
          _
        %v437 = vld [vmem:[#allocation2] sm:$0xff]
        %v438 = vld [vmem:[%s351] sm:$0xff]
        %v439 = vld [vmem:[%s371] sm:$0xff]
        %v440 = vld [vmem:[%s371 + $0x8] sm:$0xff]
        %v441 = vld [vmem:[%s371 + $0x10] sm:$0xff]
        %v442 = vld [vmem:[%s371 + $0x18] sm:$0xff]
        %v443 = vld [vmem:[%s371 + $0x20] sm:$0xff]
        %v444 = vld [vmem:[%s371 + $0x28] sm:$0xff]
        %v445 = vld [vmem:[%s371 + $0x30] sm:$0xff]
        %v446 = vld [vmem:[%s371 + $0x38] sm:$0xff]
        %v447 = vld [vmem:[%s371 + $0x40] sm:$0xff]
        %v448 = vld [vmem:[%s371 + $0x48] sm:$0xff]
        %v449 = vld [vmem:[%s371 + $0x50] sm:$0xff]
        %v450 = vld [vmem:[%s371 + $0x58] sm:$0xff]
        %v451 = vld [vmem:[%s371 + $0x60] sm:$0xff]
        %v452 = vld [vmem:[%s371 + $0x68] sm:$0xff]
        %v453 = vld [vmem:[%s371 + $0x70] sm:$0xff]
        %v454 = vld [vmem:[%s371 + $0x78] sm:$0xff]
        %455 = vmatpush.msra.mxu0 %v454
        %456 = vmatpush.msra.mxu0 %v453
        %457 = vmatpush.msra.mxu0 %v452
        %458 = vmatpush.msra.mxu0 %v451
        %459 = vmatpush.msra.mxu0 %v450
        %460 = vmatpush.msra.mxu0 %v449
        %461 = vmatpush.msra.mxu0 %v448
        %462 = vmatpush.msra.mxu0 %v447
        %463 = vmatpush.msra.mxu0 %v446
        %464 = vmatpush.msra.mxu0 %v445
        %465 = vmatpush.msra.mxu0 %v444
        %466 = vmatpush.msra.mxu0 %v443
        %467 = vmatpush.msra.mxu0 %v442
        %468 = vmatpush.msra.mxu0 %v441
        %469 = vmatpush.msra.mxu0 %v440
        %470 = vmatpush.msra.mxu0 %v439
        %471 = vmatmul.f32.gmra.mxu0 %v438
        %v472 = vpop.f32.mrf.mxu0
        %v473 = vadd.f32 0.0, %v472
        %474 = vdwg.mxu0
        %v475 = vadd.f32 %v437, %v473
        %476 = vst [vmem:[#allocation2] sm:$0xff] %v475
        %v477 = vld [vmem:[#allocation2] sm:$0xff]
        %v478 = vld [vmem:[%s361] sm:$0xff]
        %v479 = vld [vmem:[%s381] sm:$0xff]
        %v480 = vld [vmem:[%s381 + $0x8] sm:$0xff]
        %v481 = vld [vmem:[%s381 + $0x10] sm:$0xff]
        %v482 = vld [vmem:[%s381 + $0x18] sm:$0xff]
        %v483 = vld [vmem:[%s381 + $0x20] sm:$0xff]
        %v484 = vld [vmem:[%s381 + $0x28] sm:$0xff]
        %v485 = vld [vmem:[%s381 + $0x30] sm:$0xff]
        %v486 = vld [vmem:[%s381 + $0x38] sm:$0xff]
        %v487 = vld [vmem:[%s381 + $0x40] sm:$0xff]
        %v488 = vld [vmem:[%s381 + $0x48] sm:$0xff]
        %v489 = vld [vmem:[%s381 + $0x50] sm:$0xff]
        %v490 = vld [vmem:[%s381 + $0x58] sm:$0xff]
        %v491 = vld [vmem:[%s381 + $0x60] sm:$0xff]
        %v492 = vld [vmem:[%s381 + $0x68] sm:$0xff]
        %v493 = vld [vmem:[%s381 + $0x70] sm:$0xff]
        %v494 = vld [vmem:[%s381 + $0x78] sm:$0xff]
        %495 = vmatpush.msra.mxu0 %v494
        %496 = vmatpush.msra.mxu0 %v493
        %497 = vmatpush.msra.mxu0 %v492
        %498 = vmatpush.msra.mxu0 %v491
        %499 = vmatpush.msra.mxu0 %v490
        %500 = vmatpush.msra.mxu0 %v489
        %501 = vmatpush.msra.mxu0 %v488
        %502 = vmatpush.msra.mxu0 %v487
        %503 = vmatpush.msra.mxu0 %v486
        %504 = vmatpush.msra.mxu0 %v485
        %505 = vmatpush.msra.mxu0 %v484
        %506 = vmatpush.msra.mxu0 %v483
        %507 = vmatpush.msra.mxu0 %v482
        %508 = vmatpush.msra.mxu0 %v481
        %509 = vmatpush.msra.mxu0 %v480
        %510 = vmatpush.msra.mxu0 %v479
        %511 = vmatmul.f32.gmra.mxu0 %v478
        %v512 = vpop.f32.mrf.mxu0
        %v513 = vadd.f32 0.0, %v512
        %514 = vdwg.mxu0
        %v515 = vadd.f32 %v477, %v513
        %516 = vst [vmem:[#allocation2] sm:$0xff] %v515
        %p517 = scmp.eq.s32.totalorder %s37, 1
        // Predicated region
        $region61: #{tpu_custom_call.1} parent=39 // pred_check
          %p518 = pneg %p517
        $region62: #{tpu_custom_call.1} parent=39 // pred_check_branch
          %520 = sbr.rel (%p518) target = $region64
        $region63: #{tpu_custom_call.1} parent=39 // pred_region
          %v521 = vld [vmem:[#allocation2] sm:$0xff]
          %v522 = vld [vmem:[%s431] sm:$0x1]
          %v524 = vperm.slane %v522, 0
          %v526 = vadd.f32 %v521, %v524
          %527 = vst [vmem:[%s426] sm:$0xff] %v526
          %s528 = scalar_lea.vmem %s426, 8 [#allocation11]
          %529 = vst [vmem:[%s528] sm:$0xff] 0.0
        $region64: #{tpu_custom_call.1} parent=39 // pred_fallthru
          _
        %s530 = sand.u32 %s208, 1
        %s531 = scalar_lea.sflag [#allocation5], %s530
        %s532 = sand.u32 %s208, 1
        %s533 = smul.addr %s532, 16
        %s534 = scalar_lea.vmem [#allocation11], %s533
        // Predicated region
        $region65: #{tpu_custom_call.1} parent=39 // pred_check
          %p535 = pneg %p218
        $region66: #{tpu_custom_call.1} parent=39 // pred_check_branch
          %537 = sbr.rel (%p535) target = $region68
        $region67: #{tpu_custom_call.1} parent=39 // pred_region
          %539 = vsyncadd %s531, 0
          %s540 = smul.addr %s35, 2
          %s541 = sadd.s32 %s36, %s540
          %s542 = smul.addr %s34, 8
          %s543 = sadd.s32 %s541, %s542
          %s544 = smul.addr %s543, 8
          %s545 = scalar_lea.hbm %s5, %s544
          %s546 = sshll.u32 %s534, 4
          %s547 = int_to_ptr.vmem [resolvable:$true] %s546
          %s548 = sshll.u32 %s545, 4
          %s549 = int_to_ptr.hbm [resolvable:$true] %s548
          %554 = dma.vmem_to_hbm [thread:$0]  %s547, 256, %s549, %s531, 128, 512, 8
        $region68: #{tpu_custom_call.1} parent=39 // pred_fallthru
          _
      $region40: #{tpu_custom_call.1} parent=5 // pred_fallthru
        _
      %p555 = scmp.le.s32.totalorder 2, %s23
      // Predicated region
      $region69: #{tpu_custom_call.1} parent=5 // pred_check
        %p556 = pneg %p555
      $region70: #{tpu_custom_call.1} parent=5 // pred_check_branch
        %558 = sbr.rel (%p556) target = $region72
      $region71: #{tpu_custom_call.1} parent=5 // pred_region
        %s559 = ssub.s32 %s23, 2
        // Predicated region
        $region73: #{tpu_custom_call.1} parent=71 // pred_check
          %p560 = pneg %p224
        $region74: #{tpu_custom_call.1} parent=71 // pred_check_branch
          %562 = sbr.rel (%p560) target = $region76
        $region75: #{tpu_custom_call.1} parent=71 // pred_region
          %s563 = sand.u32 %s209, 1
          %s564 = scalar_lea.sflag [#allocation5], %s563
          %s565 = sand.u32 %s209, 1
          %s566 = smul.addr %s565, 16
          %s567 = scalar_lea.vmem [#allocation11], %s566
          %569 = dma.done %s564, 256
        $region76: #{tpu_custom_call.1} parent=71 // pred_fallthru
          _
      $region72: #{tpu_custom_call.1} parent=5 // pred_fallthru
        _
    $region6: #{tpu_custom_call.1} parent=1 // loop_footer
      %s27 = sadd.s32 1, %s23
    $region7: #{tpu_custom_call.1} parent=1 // loop_footer_branch
      %22 = sbr.rel target = $region3
    $region8: #{tpu_custom_call.1} parent=1 // loop_exit
      _
    %570 = vsyncpa [#allocation4], 1
    %s571 = scalar_lea.sflag [#allocation4], 1
    %572 = vsyncpa %s571, 1
    %573 = vsyncpa [#allocation7], 1
    %s574 = scalar_lea.sflag [#allocation7], 1
    %575 = vsyncpa %s574, 1
    %576 = vsyncpa [#allocation10], 1
    %s577 = scalar_lea.sflag [#allocation10], 1
    %578 = vsyncpa %s577, 1
    %579 = vsyncpa [#allocation5], 1
    %s580 = scalar_lea.sflag [#allocation5], 1
    %581 = vsyncpa %s580, 1

</llo_original>
